<compile_context>
chip_gen: v6e
topology: v6e:2x2x1
jax: 0.10.0
libtpu: 0.0.40
codegen_flags: <defaults>
</compile_context>

<pallas_src>
import jax
import jax.numpy as jnp
from jax.experimental import pallas as pl
from jax.experimental.pallas import tpu as pltpu


def highway_kernel(ehr_ref, child_ref, w_ref, b_ref, out_ref):
    ehr = ehr_ref[...]        # (Bt, E), native dtype (f32 or bf16)
    child = child_ref[...]    # (Bt, E)

    # gate pre-activation on the MXU: ehr @ W^T without materializing W^T.
    # PyTorch Linear weight layout is (out, in) -> contract dim 1 with dim 1.
    gate_pre = jax.lax.dot_general(
        ehr, w_ref[...],
        dimension_numbers=(((1,), (1,)), ((), ())),
        preferred_element_type=jnp.float32,
    ) + b_ref[...].astype(jnp.float32)                    # (Bt, E) f32

    gate = jax.nn.sigmoid(gate_pre)                       # EUP transcendental

    # highway blend in f32: child + gate * (ehr - child)
    ehr_f = ehr.astype(jnp.float32)
    child_f = child.astype(jnp.float32)
    m_t = child_f + gate * (ehr_f - child_f)
    out_ref[...] = m_t.astype(out_ref.dtype)


def highway_forward(ehrRep, childrenRep, weight, bias, *, block_b=None):
    """ehrRep, childrenRep: (B, E); weight: (E, E) in PyTorch Linear layout
    (out, in); bias: (E,). Returns m_t: (B, E) in ehrRep.dtype."""
    B, E = ehrRep.shape

    # Row tile: multiple of 8 (f32) / 16 (bf16); capped so large batches get a
    # multi-step, double-buffered grid that also fits v7x's 64 MiB VMEM.
    row_align = 16 if ehrRep.dtype == jnp.bfloat16 else 8
    cap = 2048
    if block_b is None:
        block_b = min(B, cap)
    if block_b >= B:
        block_b = B
    else:
        block_b = max(row_align, (block_b // row_align) * row_align)
    grid = (pl.cdiv(B, block_b),)

    b2 = bias.reshape(1, E)

    return pl.pallas_call(
        highway_kernel,
        out_shape=jax.ShapeDtypeStruct((B, E), ehrRep.dtype),
        grid_spec=pltpu.PrefetchScalarGridSpec(
            num_scalar_prefetch=0,
            grid=grid,
            in_specs=[
                pl.BlockSpec((block_b, E), lambda i: (i, 0)),  # ehrRep tile
                pl.BlockSpec((block_b, E), lambda i: (i, 0)),  # childrenRep tile
                pl.BlockSpec((E, E), lambda i: (0, 0)),        # weight (resident)
                pl.BlockSpec((1, E), lambda i: (0, 0)),        # bias (resident)
            ],
            out_specs=pl.BlockSpec((block_b, E), lambda i: (i, 0)),
        ),
        compiler_params=pltpu.CompilerParams(
            dimension_semantics=("parallel",),     # shards batch across TCs (v7x)
            vmem_limit_bytes=32 * 1024 * 1024,
        ),
    )(ehrRep, childrenRep, weight, b2)


def highway_reference(ehrRep, childrenRep, weight, bias):
    """Pure-JAX reference of HighwayUnit.forward (f32)."""
    gate = jax.nn.sigmoid(
        ehrRep.astype(jnp.float32) @ weight.astype(jnp.float32).T
        + bias.astype(jnp.float32))
    return (childrenRep.astype(jnp.float32) * (1.0 - gate)
            + ehrRep.astype(jnp.float32) * gate)


if __name__ == "__main__":
    # node_embedding_size = 128 (lane-dense), small batch of node representations
    E = 128   # args.node_embedding_size
    B = 8

    key = jax.random.PRNGKey(0)
    k1, k2, k3, k4 = jax.random.split(key, 4)

    # PyTorch nn.Linear default init: U(-1/sqrt(E), 1/sqrt(E))
    scale = 1.0 / jnp.sqrt(E)
    weight = jax.random.uniform(k1, (E, E), jnp.float32, -scale, scale)
    bias = jax.random.uniform(k2, (E,), jnp.float32, -scale, scale)

    ehrRep = jax.random.normal(k3, (B, E), jnp.float32)
    childrenRep = jax.random.normal(k4, (B, E), jnp.float32)

    # --- f32 path, single tile (production B=8 case) ---
    out = jax.block_until_ready(highway_forward(ehrRep, childrenRep, weight, bias))
    ref = highway_reference(ehrRep, childrenRep, weight, bias)
    assert out.shape == (B, E)
    assert jnp.allclose(out, ref, atol=1e-5, rtol=1e-5), "f32 mismatch vs reference"

    # --- f32 path, multi-step grid (exercises batch tiling / pipelining) ---
    B2 = 24
    k5, k6 = jax.random.split(k4)
    ehr2 = jax.random.normal(k5, (B2, E), jnp.float32)
    child2 = jax.random.normal(k6, (B2, E), jnp.float32)
    out2 = jax.block_until_ready(
        highway_forward(ehr2, child2, weight, bias, block_b=8))
    ref2 = highway_reference(ehr2, child2, weight, bias)
    assert jnp.allclose(out2, ref2, atol=1e-5, rtol=1e-5), "tiled mismatch vs reference"

    # --- bf16 streaming path (bf16 into the MXU, f32 accum/epilogue) ---
    ehr_bf = ehrRep.astype(jnp.bfloat16)
    child_bf = childrenRep.astype(jnp.bfloat16)
    w_bf = weight.astype(jnp.bfloat16)
    b_bf = bias.astype(jnp.bfloat16)
    out_bf = jax.block_until_ready(highway_forward(ehr_bf, child_bf, w_bf, b_bf))
    ref_bf = highway_reference(ehr_bf, child_bf, w_bf, b_bf)
    assert out_bf.dtype == jnp.bfloat16
    assert jnp.allclose(out_bf.astype(jnp.float32), ref_bf, atol=5e-2, rtol=5e-2), \
        "bf16 mismatch vs reference"

    print("KERNEL_OK")
</pallas_src>

<mosaic_0001>
module attributes {stable_mosaic.version = 11 : i64} {
  func.func @highway_kernel(%arg0: i32, %arg1: memref<8x128xf32, #tpu.memory_space<vmem>>, %arg2: memref<8x128xf32, #tpu.memory_space<vmem>>, %arg3: memref<128x128xf32, #tpu.memory_space<vmem>>, %arg4: memref<1x128xf32, #tpu.memory_space<vmem>>, %arg5: memref<8x128xf32, #tpu.memory_space<vmem>>) attributes {dimension_semantics = [#tpu.dimension_semantics<parallel>], iteration_bounds = array<i64: 1>, scalar_prefetch = 0 : i64, scratch_operands = 0 : i64, tpu.core_type = #tpu.core_type<tc>, window_params = [{transform_indices = @transform_0, window_bounds = array<i64: 8, 128>}, {transform_indices = @transform_1, window_bounds = array<i64: 8, 128>}, {pipeline_mode = #tpu.pipeline_mode<synchronous>, transform_indices = @transform_2, window_bounds = array<i64: 128, 128>}, {pipeline_mode = #tpu.pipeline_mode<synchronous>, transform_indices = @transform_3, window_bounds = array<i64: 1, 128>}, {transform_indices = @transform_4, window_bounds = array<i64: 8, 128>}]} {
    %c0 = arith.constant 0 : index
    %c0_0 = arith.constant 0 : index
    %0 = vector.load %arg1[%c0, %c0_0] : memref<8x128xf32, #tpu.memory_space<vmem>>, vector<8x128xf32>
    %c0_1 = arith.constant 0 : index
    %c0_2 = arith.constant 0 : index
    %1 = vector.load %arg2[%c0_1, %c0_2] : memref<8x128xf32, #tpu.memory_space<vmem>>, vector<8x128xf32>
    %c0_3 = arith.constant 0 : index
    %c0_4 = arith.constant 0 : index
    %2 = vector.load %arg3[%c0_3, %c0_4] : memref<128x128xf32, #tpu.memory_space<vmem>>, vector<128x128xf32>
    %cst = arith.constant dense<0.000000e+00> : vector<8x128xf32>
    %3 = tpu.matmul %0, %2, %cst {dimension_numbers = #tpu.dot_dimension_numbers<[1], [1], [0], [0], [0, 0, 1, 0], [], []>} : vector<8x128xf32>, vector<128x128xf32>, vector<8x128xf32> -> vector<8x128xf32>
    %c0_5 = arith.constant 0 : index
    %c0_6 = arith.constant 0 : index
    %4 = vector.load %arg4[%c0_5, %c0_6] : memref<1x128xf32, #tpu.memory_space<vmem>>, vector<1x128xf32>
    %5 = vector.broadcast %4 : vector<1x128xf32> to vector<8x128xf32>
    %6 = arith.addf %3, %5 : vector<8x128xf32>
    %7 = arith.negf %6 : vector<8x128xf32>
    %8 = math.exp %7 : vector<8x128xf32>
    %cst_7 = arith.constant 1.000000e+00 : f32
    %9 = vector.broadcast %cst_7 : f32 to vector<8x128xf32>
    %10 = arith.addf %9, %8 : vector<8x128xf32>
    %11 = arith.divf %9, %10 : vector<8x128xf32>
    %12 = arith.subf %0, %1 : vector<8x128xf32>
    %13 = arith.mulf %11, %12 : vector<8x128xf32>
    %14 = arith.addf %1, %13 : vector<8x128xf32>
    %c0_8 = arith.constant 0 : index
    %c0_9 = arith.constant 0 : index
    %15 = vector.load %arg5[%c0_8, %c0_9] : memref<8x128xf32, #tpu.memory_space<vmem>>, vector<8x128xf32>
    tpu.vector_store %arg5[%c0_8, %c0_9], %14 {strides = array<i32>} : memref<8x128xf32, #tpu.memory_space<vmem>>, vector<8x128xf32>,
    return
  }
  func.func @transform_0(%arg0: i32) -> (i32, i32) {
    %c0_i32 = arith.constant 0 : i32
    %c0_i32_0 = arith.constant 0 : i32
    return %arg0, %c0_i32 : i32, i32
  }
  func.func @transform_1(%arg0: i32) -> (i32, i32) {
    %c0_i32 = arith.constant 0 : i32
    %c0_i32_0 = arith.constant 0 : i32
    return %arg0, %c0_i32 : i32, i32
  }
  func.func @transform_2(%arg0: i32) -> (i32, i32) {
    %c0_i32 = arith.constant 0 : i32
    %c0_i32_0 = arith.constant 0 : i32
    %c0_i32_1 = arith.constant 0 : i32
    return %c0_i32, %c0_i32_0 : i32, i32
  }
  func.func @transform_3(%arg0: i32) -> (i32, i32) {
    %c0_i32 = arith.constant 0 : i32
    %c0_i32_0 = arith.constant 0 : i32
    %c0_i32_1 = arith.constant 0 : i32
    return %c0_i32, %c0_i32_0 : i32, i32
  }
  func.func @transform_4(%arg0: i32) -> (i32, i32) {
    %c0_i32 = arith.constant 0 : i32
    %c0_i32_0 = arith.constant 0 : i32
    return %arg0, %c0_i32 : i32, i32
  }
}

</mosaic_0001>

<llo_original>
// kernel: tpu_custom_call.1
$region0: #{tpu_custom_call.1}
  #allocation0 [shape = 'u32[]', space=smem, size = 0x4, offset = 0x4, fixed_abs, tag = 'smem constant byte address 0x4 - core index']
  #allocation1 [shape = 'u32[144,128]{1,0:T(1,128)}', space=vmem, size = 0x12000, scoped, tag = 'internal scratch']
  %s0 = inlined_call_operand.hbm [shape: f32[8,128], index: 0, kind: input, shape index: {}]
  %s1 = inlined_call_operand.hbm [shape: f32[8,128], index: 1, kind: input, shape index: {}]
  %s2 = inlined_call_operand.hbm [shape: f32[128,128], index: 2, kind: input, shape index: {}]
  %s3 = inlined_call_operand.vmem [shape: f32[1,128], index: 3, kind: input, shape index: {}]
  %s4 = inlined_call_operand.hbm [shape: f32[8,128], index: 4, kind: output, shape index: {}]
  %s5 = sld [smem:[#allocation0]]
  $region38: #{tpu_custom_call.1} parent=0
    _
  %s7 = ssub.s32 1, %s5
  %s8 = scalar_select 0, %s7, %s5
  $region1: #{tpu_custom_call.1} parent=0
    #allocation2 [shape = 'u8[4096]{0}', space=vmem, size = 0x1000, scoped, tag = 'input window, operand 0, single buffered']
    #allocation3 [shape = 's32[1]{0}', space=sflag, size = 0x4, scoped, tag = 'scoped memory for tpu_custom_call.1']
    #allocation4 [shape = 's32[1]{0}', space=sflag, size = 0x4, scoped, tag = 'scoped memory for tpu_custom_call.1']
    #allocation5 [shape = 'u8[4096]{0}', space=vmem, size = 0x1000, scoped, tag = 'input window, operand 1, single buffered']
    #allocation6 [shape = 's32[1]{0}', space=sflag, size = 0x4, scoped, tag = 'scoped memory for tpu_custom_call.1']
    #allocation7 [shape = 'u8[65536]{0}', space=vmem, size = 0x10000, scoped, tag = 'input window, operand 2, single buffered']
    #allocation8 [shape = 'u8[4096]{0}', space=vmem, size = 0x1000, scoped, tag = 'output window, operand 0, single buffered']
    %9 = vsyncpa [#allocation3], 0
    %10 = vsyncpa [#allocation6], 0
    %11 = vsyncpa [#allocation4], 0
    // Predicated region
    $region2: #{tpu_custom_call.1} parent=1 // pred_check
      _
    $region3: #{tpu_custom_call.1} parent=1 // pred_check_branch
      %13 = sbr.rel (0) target = $region5
    $region4: #{tpu_custom_call.1} parent=1 // pred_region
      %s15 = ssub.s32 128, 128
      %16 = vsyncadd [#allocation3], %s15
      %s18 = sshll.u32 [#allocation2], 4
      %s19 = int_to_ptr.vmem [resolvable:$true] %s18
      %21 = dma.hbm_to_vmem [thread:$0]  %s0, 128, %s19, [#allocation3]
    $region5: #{tpu_custom_call.1} parent=1 // pred_fallthru
      _
    // Predicated region
    $region6: #{tpu_custom_call.1} parent=1 // pred_check
      _
    $region7: #{tpu_custom_call.1} parent=1 // pred_check_branch
      %23 = sbr.rel (0) target = $region9
    $region8: #{tpu_custom_call.1} parent=1 // pred_region
      %s25 = ssub.s32 128, 128
      %26 = vsyncadd [#allocation6], %s25
      %s28 = sshll.u32 [#allocation5], 4
      %s29 = int_to_ptr.vmem [resolvable:$true] %s28
      %31 = dma.hbm_to_vmem [thread:$0]  %s1, 128, %s29, [#allocation6]
    $region9: #{tpu_custom_call.1} parent=1 // pred_fallthru
      _
    // Predicated region
    $region10: #{tpu_custom_call.1} parent=1 // pred_check
      _
    $region11: #{tpu_custom_call.1} parent=1 // pred_check_branch
      %33 = sbr.rel (0) target = $region13
    $region12: #{tpu_custom_call.1} parent=1 // pred_region
      %s35 = ssub.s32 2048, 2048
      %36 = vsyncadd [#allocation6], %s35
      %s37 = sshll.u32 [#allocation7], 4
      %s38 = int_to_ptr.vmem [resolvable:$true] %s37
      %43 = dma.hbm_to_vmem [thread:$0]  %s2, 2048, %s38, [#allocation6], 128, 128, 8
    $region13: #{tpu_custom_call.1} parent=1 // pred_fallthru
      _
    // Predicated region
    $region14: #{tpu_custom_call.1} parent=1 // pred_check
      _
    $region15: #{tpu_custom_call.1} parent=1 // pred_check_branch
      %45 = sbr.rel (0) target = $region17
    $region16: #{tpu_custom_call.1} parent=1 // pred_region
      _
    $region17: #{tpu_custom_call.1} parent=1 // pred_fallthru
      _
    // Predicated region
    $region18: #{tpu_custom_call.1} parent=1 // pred_check
      _
    $region19: #{tpu_custom_call.1} parent=1 // pred_check_branch
      %47 = sbr.rel (0) target = $region21
    $region20: #{tpu_custom_call.1} parent=1 // pred_region
      %48 = dma.done [#allocation3], 128
    $region21: #{tpu_custom_call.1} parent=1 // pred_fallthru
      _
    // Predicated region
    $region22: #{tpu_custom_call.1} parent=1 // pred_check
      _
    $region23: #{tpu_custom_call.1} parent=1 // pred_check_branch
      %50 = sbr.rel (0) target = $region25
    $region24: #{tpu_custom_call.1} parent=1 // pred_region
      %51 = dma.done [#allocation6], 128
    $region25: #{tpu_custom_call.1} parent=1 // pred_fallthru
      _
    // Predicated region
    $region26: #{tpu_custom_call.1} parent=1 // pred_check
      _
    $region27: #{tpu_custom_call.1} parent=1 // pred_check_branch
      %53 = sbr.rel (0) target = $region29
    $region28: #{tpu_custom_call.1} parent=1 // pred_region
      %54 = dma.done [#allocation6], 2048
    $region29: #{tpu_custom_call.1} parent=1 // pred_fallthru
      _
    %v55 = vld [vmem:[#allocation2] sm:$0xff]
    %v56 = vld [vmem:[#allocation5] sm:$0xff]
    %v57 = vld [vmem:[#allocation7] sm:$0xff]
    %v58 = vld [vmem:[#allocation7 + $0x8] sm:$0xff]
    %v59 = vld [vmem:[#allocation7 + $0x10] sm:$0xff]
    %v60 = vld [vmem:[#allocation7 + $0x18] sm:$0xff]
    %v61 = vld [vmem:[#allocation7 + $0x20] sm:$0xff]
    %v62 = vld [vmem:[#allocation7 + $0x28] sm:$0xff]
    %v63 = vld [vmem:[#allocation7 + $0x30] sm:$0xff]
    %v64 = vld [vmem:[#allocation7 + $0x38] sm:$0xff]
    %v65 = vld [vmem:[#allocation7 + $0x40] sm:$0xff]
    %v66 = vld [vmem:[#allocation7 + $0x48] sm:$0xff]
    %v67 = vld [vmem:[#allocation7 + $0x50] sm:$0xff]
    %v68 = vld [vmem:[#allocation7 + $0x58] sm:$0xff]
    %v69 = vld [vmem:[#allocation7 + $0x60] sm:$0xff]
    %v70 = vld [vmem:[#allocation7 + $0x68] sm:$0xff]
    %v71 = vld [vmem:[#allocation7 + $0x70] sm:$0xff]
    %v72 = vld [vmem:[#allocation7 + $0x78] sm:$0xff]
    %v73 = vld [vmem:[%s3] sm:$0x1]
    %v75 = vlaneseq
    %v76 = vshrl.u32 %v75, 7
    %v77 = vsub.s32 0, %v76
    %v78 = vrot.slane %v73, %v77
    %80 = vmatprep.subr.mxu0 0.0
    %81 = vmatpush1.xpose.msra.mxu0 %v72
    %82 = vmatprep.subr.mxu0 0.0
    %83 = vmatpush1.xpose.msra.mxu0 %v71
    %84 = vmatprep.subr.mxu0 0.0
    %85 = vmatpush1.xpose.msra.mxu0 %v70
    %86 = vmatprep.subr.mxu0 0.0
    %87 = vmatpush1.xpose.msra.mxu0 %v69
    %88 = vmatprep.subr.mxu0 0.0
    %89 = vmatpush1.xpose.msra.mxu0 %v68
    %90 = vmatprep.subr.mxu0 0.0
    %91 = vmatpush1.xpose.msra.mxu0 %v67
    %92 = vmatprep.subr.mxu0 0.0
    %93 = vmatpush1.xpose.msra.mxu0 %v66
    %94 = vmatprep.subr.mxu0 0.0
    %95 = vmatpush1.xpose.msra.mxu0 %v65
    %96 = vmatprep.subr.mxu0 0.0
    %97 = vmatpush1.xpose.msra.mxu0 %v64
    %98 = vmatprep.subr.mxu0 0.0
    %99 = vmatpush1.xpose.msra.mxu0 %v63
    %100 = vmatprep.subr.mxu0 0.0
    %101 = vmatpush1.xpose.msra.mxu0 %v62
    %102 = vmatprep.subr.mxu0 0.0
    %103 = vmatpush1.xpose.msra.mxu0 %v61
    %104 = vmatprep.subr.mxu0 0.0
    %105 = vmatpush1.xpose.msra.mxu0 %v60
    %106 = vmatprep.subr.mxu0 0.0
    %107 = vmatpush1.xpose.msra.mxu0 %v59
    %108 = vmatprep.subr.mxu0 0.0
    %109 = vmatpush1.xpose.msra.mxu0 %v58
    %110 = vmatprep.subr.mxu0 0.0
    %111 = vmatpush1.xpose.msra.mxu0 %v57
    %112 = vmatprep.subr.mxu0 0.0
    %113 = vmatpush2.xpose.msra.mxu0 0.0
    %114 = vmatprep.subr.mxu0 0.0
    %115 = vmatpush2.xpose.msra.mxu0 0.0
    %116 = vmatprep.subr.mxu0 0.0
    %117 = vmatpush2.xpose.msra.mxu0 0.0
    %118 = vmatprep.subr.mxu0 0.0
    %119 = vmatpush2.xpose.msra.mxu0 0.0
    %120 = vmatprep.subr.mxu0 0.0
    %121 = vmatpush2.xpose.msra.mxu0 0.0
    %122 = vmatprep.subr.mxu0 0.0
    %123 = vmatpush2.xpose.msra.mxu0 0.0
    %124 = vmatprep.subr.mxu0 0.0
    %125 = vmatpush2.xpose.msra.mxu0 0.0
    %126 = vmatprep.subr.mxu0 0.0
    %127 = vmatpush2.xpose.msra.mxu0 0.0
    %128 = vmatprep.subr.mxu0 0.0
    %129 = vmatpush2.xpose.msra.mxu0 0.0
    %130 = vmatprep.subr.mxu0 0.0
    %131 = vmatpush2.xpose.msra.mxu0 0.0
    %132 = vmatprep.subr.mxu0 0.0
    %133 = vmatpush2.xpose.msra.mxu0 0.0
    %134 = vmatprep.subr.mxu0 0.0
    %135 = vmatpush2.xpose.msra.mxu0 0.0
    %136 = vmatprep.subr.mxu0 0.0
    %137 = vmatpush2.xpose.msra.mxu0 0.0
    %138 = vmatprep.subr.mxu0 0.0
    %139 = vmatpush2.xpose.msra.mxu0 0.0
    %140 = vmatprep.subr.mxu0 0.0
    %141 = vmatpush2.xpose.msra.mxu0 0.0
    %142 = vmatprep.subr.mxu0 0.0
    %143 = vmatpush2.xpose.msra.mxu0 0.0
    %144 = vmatprep.mubr.f32.mxu0 0.0
    %145 = vmatmul.mubr.f32.gmra.mxu0 %v55
    %v146 = vpop.f32.mrf.mxu0
    %v147 = vadd.f32 %v78, %v146
    %v148 = vpop.f32.mrf.mxu0
    %149 = vdwg.mxu0
    %v150 = vxor.u32 %v147, 2147483648
    %v151 = vmul.f32 %v150, 1.442695
    %v152 = vpow.pop %v151
    %v153 = vadd.f32 %v152, 1.0
    %v154 = vrcp.pop %v153
    %v155 = vmul.f32 1.0, %v154
    %v156 = vsub.f32 %v55, %v56
    %v157 = vmul.f32 %v155, %v156
    %v158 = vadd.f32 %v56, %v157
    %159 = vst [vmem:[#allocation8] sm:$0xff] %v158
    // Predicated region
    $region30: #{tpu_custom_call.1} parent=1 // pred_check
      _
    $region31: #{tpu_custom_call.1} parent=1 // pred_check_branch
      %161 = sbr.rel (0) target = $region33
    $region32: #{tpu_custom_call.1} parent=1 // pred_region
      %s163 = ssub.s32 128, 128
      %164 = vsyncadd [#allocation4], %s163
      %s166 = sshll.u32 [#allocation8], 4
      %s167 = int_to_ptr.vmem [resolvable:$true] %s166
      %169 = dma.vmem_to_hbm [thread:$0]  %s167, 128, %s4, [#allocation4]
    $region33: #{tpu_custom_call.1} parent=1 // pred_fallthru
      _
    // Predicated region
    $region34: #{tpu_custom_call.1} parent=1 // pred_check
      _
    $region35: #{tpu_custom_call.1} parent=1 // pred_check_branch
      %171 = sbr.rel (0) target = $region37
    $region36: #{tpu_custom_call.1} parent=1 // pred_region
      %172 = dma.done [#allocation4], 128
    $region37: #{tpu_custom_call.1} parent=1 // pred_fallthru
      _
    %173 = vsyncpa [#allocation3], 1
    %174 = vsyncpa [#allocation6], 1
    %175 = vsyncpa [#allocation4], 1

</llo_original>
